<compile_context>
chip_gen: v5e
topology: v5e:2x2
jax: 0.10.0
libtpu: 0.0.40
codegen_flags: <defaults>
</compile_context>

<pallas_src>
import jax
import jax.numpy as jnp
from jax import lax
from jax.experimental import pallas as pl
from jax.experimental.pallas import tpu as pltpu


def _round_up(x, m):
    return ((x + m - 1) // m) * m


def _make_kernel(batch_size, tile_rows, num_classes, full_tiles, tiles_per_core):
    inv_b = 1.0 / float(batch_size)

    def kernel(lbl_ref, f_ref, c_ref, o_ref, acc_ref):
        core = pl.program_id(0)
        t = pl.program_id(1)
        global_tile = core * tiles_per_core + t

        @pl.when(t == 0)
        def _init():
            acc_ref[...] = jnp.zeros_like(acc_ref)

        # One-hot gather of centers[labels] on the MXU.
        labels = lbl_ref[...]                                            # (TB, 1) i32
        class_ids = lax.broadcasted_iota(
            jnp.int32, (tile_rows, num_classes), 1)                      # (TB, C)
        one_hot = (class_ids == labels).astype(jnp.float32)              # (TB, C)
        batch_centers = jnp.dot(one_hot, c_ref[...],
                                preferred_element_type=jnp.float32)      # (TB, D)

        d = f_ref[...] - batch_centers                                   # VPU
        dd = d * d

        # Only tiles that can contain rows >= batch_size pay for the mask.
        is_ragged = global_tile >= full_tiles

        @pl.when(is_ragged)
        def _accum_masked():
            row_ids = global_tile * tile_rows + lax.broadcasted_iota(
                jnp.int32, (tile_rows, 1), 0)
            dd_m = jnp.where(row_ids < batch_size, dd, 0.0)
            acc_ref[...] += jnp.sum(dd_m, axis=0, keepdims=True)

        @pl.when(jnp.logical_not(is_ragged))
        def _accum_full():
            acc_ref[...] += jnp.sum(dd, axis=0, keepdims=True)

        @pl.when(t == pl.num_programs(1) - 1)
        def _finalize():
            total = jnp.sum(acc_ref[...])                                # one XLU reduce
            o_ref[...] = jnp.broadcast_to(total * (0.5 * inv_b), o_ref.shape)

    return kernel


def center_loss_pallas(features, labels, centers, tile_rows=None):
    """features: (B, D) f32, labels: (B,) int, centers: (C, D) f32 -> scalar f32."""
    B, D = features.shape
    C, Dc = centers.shape
    assert D == Dc

    f = features.astype(jnp.float32)
    cen = centers.astype(jnp.float32)
    lbl = labels.astype(jnp.int32).reshape(B, 1)

    # Tiny-batch fallback (B < 8): pad to 8 rows so the (8, 128) block rule is
    # met; the in-kernel mask against the *original* B drops the pad rows.
    B_rows = B
    if B_rows < 8:
        pad = 8 - B_rows
        f = jnp.pad(f, ((0, pad), (0, 0)))
        lbl = jnp.pad(lbl, ((0, pad), (0, 0)))
        B_rows = 8

    # Batch tile: multiple of 8, <= B_rows, targeting ~4 MiB feature blocks.
    if tile_rows is None:
        rows = (4 << 20) // (_round_up(D, 128) * 4)
        rows = min(max((rows // 8) * 8, 8), 1024)
    else:
        rows = _round_up(int(tile_rows), 8)
    TB = max(8, min(rows, (B_rows // 8) * 8))

    num_tiles = -(-B_rows // TB)
    full_tiles = B // TB                  # tiles whose rows are all < B
    NC = 2 if num_tiles >= 2 else 1       # leading "parallel" axis -> both v7x TCs
    tpc = -(-num_tiles // NC)
    last_tile = num_tiles - 1

    if NC * tpc == num_tiles:
        def row_map(c, t):
            return (c * tpc + t, 0)
    else:
        # Odd tile count split over 2 cores: clamp the overshoot tile; its rows
        # are all >= B so the in-kernel mask zeroes its contribution.
        def row_map(c, t):
            return (jnp.minimum(c * tpc + t, last_tile), 0)

    kernel = _make_kernel(B, TB, C, full_tiles, tpc)

    # Explicit VMEM budget: double-buffered feature/label/centers/out blocks
    # plus the accumulator scratch, with headroom (fits v7x's 64 MiB cap).
    lane = 128
    need = (2 * (TB * _round_up(D, lane) + TB * lane
                 + _round_up(C, 8) * _round_up(D, lane) + 8 * lane)
            + 8 * _round_up(D, lane)) * 4 + (1 << 20)
    vmem_limit = int(min(64 << 20, max(32 << 20, int(1.5 * need))))

    cost = pl.CostEstimate(
        flops=2 * B_rows * C * D + 4 * B_rows * D,
        transcendentals=0,
        bytes_accessed=4 * (B_rows * D + C * D + B_rows) + 4 * NC,
    )

    out = pl.pallas_call(
        kernel,
        out_shape=jax.ShapeDtypeStruct((NC, 8, 128), jnp.float32),
        grid_spec=pltpu.PrefetchScalarGridSpec(
            num_scalar_prefetch=0,
            grid=(NC, tpc),
            in_specs=[
                # labels tile: (TB, 1) int32 in VMEM
                pl.BlockSpec((TB, 1), row_map),
                # features tile: TB rows of the batch
                pl.BlockSpec((TB, D), row_map),
                # centers: full table, resident across the whole grid
                pl.BlockSpec((C, D), lambda c, t: (0, 0)),
            ],
            # per-core, lane-aligned partial output block
            out_specs=pl.BlockSpec((1, 8, 128), lambda c, t: (c, 0, 0)),
            scratch_shapes=[pltpu.VMEM((1, D), jnp.float32)],
        ),
        compiler_params=pltpu.CompilerParams(
            dimension_semantics=("parallel", "arbitrary"),
            vmem_limit_bytes=vmem_limit),
        cost_estimate=cost,
    )(lbl, f, cen)

    # Each per-core partial is already scaled by 0.5/B; just sum them.
    return jnp.sum(out[:, 0, 0])


def center_loss_ref(features, labels, centers):
    batch_centers = centers[labels]
    diff = features - batch_centers
    return 0.5 * jnp.sum(diff * diff) / features.shape[0]


if __name__ == "__main__":
    # Small deterministic setup: num_classes=10, feat_dim=32, batch=8.
    num_classes, feat_dim, batch = 10, 32, 8

    key = jax.random.PRNGKey(0)
    k_feat, k_lbl, k_ctr = jax.random.split(key, 3)

    features = jax.random.normal(k_feat, (batch, feat_dim), dtype=jnp.float32)
    labels = jax.random.randint(k_lbl, (batch,), 0, num_classes, dtype=jnp.int32)
    centers = jax.random.normal(k_ctr, (num_classes, feat_dim), dtype=jnp.float32)

    loss = jax.block_until_ready(center_loss_pallas(features, labels, centers))
    ref = jax.block_until_ready(center_loss_ref(features, labels, centers))
    assert jnp.allclose(loss, ref, rtol=1e-5, atol=1e-5), (loss, ref)

    # Ragged last tile + odd tile count split over the 2-core grid (clamp path).
    b2 = 300
    k1, k2 = jax.random.split(k_feat)
    features2 = jax.random.normal(k1, (b2, feat_dim), dtype=jnp.float32)
    labels2 = jax.random.randint(k2, (b2,), 0, num_classes, dtype=jnp.int32)
    loss2 = jax.block_until_ready(
        center_loss_pallas(features2, labels2, centers, tile_rows=128))
    ref2 = jax.block_until_ready(center_loss_ref(features2, labels2, centers))
    assert jnp.allclose(loss2, ref2, rtol=1e-4, atol=1e-4), (loss2, ref2)

    # Even tile split across the two-core grid, all-full tiles.
    b3 = 1024
    k3, k4 = jax.random.split(k_lbl)
    features3 = jax.random.normal(k3, (b3, feat_dim), dtype=jnp.float32)
    labels3 = jax.random.randint(k4, (b3,), 0, num_classes, dtype=jnp.int32)
    loss3 = jax.block_until_ready(
        center_loss_pallas(features3, labels3, centers, tile_rows=256))
    ref3 = jax.block_until_ready(center_loss_ref(features3, labels3, centers))
    assert jnp.allclose(loss3, ref3, rtol=1e-4, atol=1e-4), (loss3, ref3)

    print("KERNEL_OK")
</pallas_src>

<mosaic_0001>
module attributes {stable_mosaic.version = 11 : i64} {
  func.func @kernel(%arg0: i32, %arg1: i32, %arg2: memref<8x1xi32, #tpu.memory_space<vmem>>, %arg3: memref<8x32xf32, #tpu.memory_space<vmem>>, %arg4: memref<10x32xf32, #tpu.memory_space<vmem>>, %arg5: memref<1x8x128xf32, #tpu.memory_space<vmem>>, %arg6: memref<1x32xf32, #tpu.memory_space<vmem>>) attributes {dimension_semantics = [#tpu.dimension_semantics<parallel>, #tpu.dimension_semantics<arbitrary>], iteration_bounds = array<i64: 1, 1>, scalar_prefetch = 0 : i64, scratch_operands = 1 : i64, tpu.core_type = #tpu.core_type<tc>, window_params = [{transform_indices = @transform_0, window_bounds = array<i64: 8, 1>}, {transform_indices = @transform_1, window_bounds = array<i64: 8, 32>}, {pipeline_mode = #tpu.pipeline_mode<synchronous>, transform_indices = @transform_2, window_bounds = array<i64: 10, 32>}, {transform_indices = @transform_3, window_bounds = array<i64: 1, 8, 128>}]} {
    %c1_i32 = arith.constant 1 : i32
    %0 = arith.muli %arg0, %c1_i32 : i32
    %1 = arith.addi %0, %arg1 : i32
    %c0_i32 = arith.constant 0 : i32
    %2 = arith.cmpi eq, %arg1, %c0_i32 : i32
    %3 = arith.extui %2 : i1 to i32
    %c0_i32_0 = arith.constant 0 : i32
    %4 = arith.cmpi ne, %3, %c0_i32_0 : i32
    scf.if %4 {
      %cst_11 = arith.constant 0.000000e+00 : f32
      %25 = vector.broadcast %cst_11 : f32 to vector<1x32xf32>
      %c0_12 = arith.constant 0 : index
      %c0_13 = arith.constant 0 : index
      %26 = vector.load %arg6[%c0_12, %c0_13] : memref<1x32xf32, #tpu.memory_space<vmem>>, vector<1x32xf32>
      tpu.vector_store %arg6[%c0_12, %c0_13], %25 {strides = array<i32>} : memref<1x32xf32, #tpu.memory_space<vmem>>, vector<1x32xf32>,
    } else {
    }
    %c0 = arith.constant 0 : index
    %c0_1 = arith.constant 0 : index
    %5 = vector.load %arg2[%c0, %c0_1] : memref<8x1xi32, #tpu.memory_space<vmem>>, vector<8x1xi32>
    %6 = tpu.iota {dimensions = array<i32: 1>} : vector<8x10xi32>
    %7 = vector.broadcast %5 : vector<8x1xi32> to vector<8x10xi32>
    %8 = arith.cmpi eq, %6, %7 : vector<8x10xi32>
    %9 = arith.extui %8 : vector<8x10xi1> to vector<8x10xi32>
    %10 = arith.sitofp %9 : vector<8x10xi32> to vector<8x10xf32>
    %c0_2 = arith.constant 0 : index
    %c0_3 = arith.constant 0 : index
    %11 = vector.load %arg4[%c0_2, %c0_3] : memref<10x32xf32, #tpu.memory_space<vmem>>, vector<10x32xf32>
    %cst = arith.constant dense<0.000000e+00> : vector<8x32xf32>
    %12 = tpu.matmul %10, %11, %cst {dimension_numbers = #tpu.dot_dimension_numbers<[1], [0], [0], [1], [0, 0, 1, 1], [], []>} : vector<8x10xf32>, vector<10x32xf32>, vector<8x32xf32> -> vector<8x32xf32>
    %c0_4 = arith.constant 0 : index
    %c0_5 = arith.constant 0 : index
    %13 = vector.load %arg3[%c0_4, %c0_5] : memref<8x32xf32, #tpu.memory_space<vmem>>, vector<8x32xf32>
    %14 = arith.subf %13, %12 : vector<8x32xf32>
    %15 = arith.mulf %14, %14 : vector<8x32xf32>
    %c1_i32_6 = arith.constant 1 : i32
    %16 = arith.cmpi sge, %1, %c1_i32_6 : i32
    %17 = arith.extui %16 : i1 to i32
    %c0_i32_7 = arith.constant 0 : i32
    %18 = arith.cmpi ne, %17, %c0_i32_7 : i32
    scf.if %18 {
      %c8_i32 = arith.constant 8 : i32
      %25 = arith.muli %1, %c8_i32 : i32
      %26 = tpu.iota {dimensions = array<i32: 0>} : vector<8x1xi32>
      %27 = vector.broadcast %25 : i32 to vector<8x1xi32>
      %28 = arith.addi %27, %26 : vector<8x1xi32>
      %c8_i32_11 = arith.constant 8 : i32
      %29 = vector.broadcast %c8_i32_11 : i32 to vector<8x1xi32>
      %30 = arith.cmpi slt, %28, %29 : vector<8x1xi32>
      %cst_12 = arith.constant 0.000000e+00 : f32
      %31 = vector.shape_cast %30 : vector<8x1xi1> to vector<8x1xi1>
      %32 = vector.broadcast %31 : vector<8x1xi1> to vector<8x32xi1>
      %33 = vector.broadcast %cst_12 : f32 to vector<8x32xf32>
      %34 = arith.select %32, %15, %33 : vector<8x32xi1>, vector<8x32xf32>
      %c0_13 = arith.constant 0 : index
      %c0_14 = arith.constant 0 : index
      %35 = vector.load %arg6[%c0_13, %c0_14] : memref<1x32xf32, #tpu.memory_space<vmem>>, vector<1x32xf32>
      %cst_15 = arith.constant dense<0.000000e+00> : vector<32xf32>
      %36 = vector.multi_reduction <add>, %34, %cst_15 [0] : vector<8x32xf32> to vector<32xf32>
      %37 = vector.shape_cast %36 : vector<32xf32> to vector<1x32xf32>
      %38 = arith.addf %35, %37 : vector<1x32xf32>
      %c0_16 = arith.constant 0 : index
      %c0_17 = arith.constant 0 : index
      %39 = vector.load %arg6[%c0_16, %c0_17] : memref<1x32xf32, #tpu.memory_space<vmem>>, vector<1x32xf32>
      tpu.vector_store %arg6[%c0_16, %c0_17], %38 {strides = array<i32>} : memref<1x32xf32, #tpu.memory_space<vmem>>, vector<1x32xf32>,
    } else {
    }
    %true = arith.constant true
    %19 = arith.xori %16, %true : i1
    %20 = arith.extui %19 : i1 to i32
    %c0_i32_8 = arith.constant 0 : i32
    %21 = arith.cmpi ne, %20, %c0_i32_8 : i32
    scf.if %21 {
      %c0_11 = arith.constant 0 : index
      %c0_12 = arith.constant 0 : index
      %25 = vector.load %arg6[%c0_11, %c0_12] : memref<1x32xf32, #tpu.memory_space<vmem>>, vector<1x32xf32>
      %cst_13 = arith.constant dense<0.000000e+00> : vector<32xf32>
      %26 = vector.multi_reduction <add>, %15, %cst_13 [0] : vector<8x32xf32> to vector<32xf32>
      %27 = vector.shape_cast %26 : vector<32xf32> to vector<1x32xf32>
      %28 = arith.addf %25, %27 : vector<1x32xf32>
      %c0_14 = arith.constant 0 : index
      %c0_15 = arith.constant 0 : index
      %29 = vector.load %arg6[%c0_14, %c0_15] : memref<1x32xf32, #tpu.memory_space<vmem>>, vector<1x32xf32>
      tpu.vector_store %arg6[%c0_14, %c0_15], %28 {strides = array<i32>} : memref<1x32xf32, #tpu.memory_space<vmem>>, vector<1x32xf32>,
    } else {
    }
    %c0_i32_9 = arith.constant 0 : i32
    %22 = arith.cmpi eq, %arg1, %c0_i32_9 : i32
    %23 = arith.extui %22 : i1 to i32
    %c0_i32_10 = arith.constant 0 : i32
    %24 = arith.cmpi ne, %23, %c0_i32_10 : i32
    scf.if %24 {
      %c0_11 = arith.constant 0 : index
      %c0_12 = arith.constant 0 : index
      %25 = vector.load %arg6[%c0_11, %c0_12] : memref<1x32xf32, #tpu.memory_space<vmem>>, vector<1x32xf32>
      %26 = vector.shape_cast %25 : vector<1x32xf32> to vector<1x1x32xf32>
      %cst_13 = arith.constant dense<0.000000e+00> : vector<1xf32>
      %27 = vector.multi_reduction <add>, %26, %cst_13 [1, 2] : vector<1x1x32xf32> to vector<1xf32>
      %28 = vector.shape_cast %27 : vector<1xf32> to vector<1x1x1xf32>
      %29 = vector.extract %28[0, 0, 0] : f32 from vector<1x1x1xf32>
      %cst_14 = arith.constant 6.250000e-02 : f32
      %30 = arith.mulf %29, %cst_14 : f32
      %31 = vector.broadcast %30 : f32 to vector<1x8x128xf32>
      %c0_15 = arith.constant 0 : index
      %c0_16 = arith.constant 0 : index
      %c0_17 = arith.constant 0 : index
      %32 = vector.load %arg5[%c0_15, %c0_16, %c0_17] : memref<1x8x128xf32, #tpu.memory_space<vmem>>, vector<1x8x128xf32>
      tpu.vector_store %arg5[%c0_15, %c0_16, %c0_17], %31 {strides = array<i32>} : memref<1x8x128xf32, #tpu.memory_space<vmem>>, vector<1x8x128xf32>,
    } else {
    }
    return
  }
  func.func @transform_0(%arg0: i32, %arg1: i32) -> (i32, i32) {
    %c1_i32 = arith.constant 1 : i32
    %0 = arith.muli %arg0, %c1_i32 : i32
    %1 = arith.addi %0, %arg1 : i32
    %c0_i32 = arith.constant 0 : i32
    %c0_i32_0 = arith.constant 0 : i32
    return %1, %c0_i32 : i32, i32
  }
  func.func @transform_1(%arg0: i32, %arg1: i32) -> (i32, i32) {
    %c1_i32 = arith.constant 1 : i32
    %0 = arith.muli %arg0, %c1_i32 : i32
    %1 = arith.addi %0, %arg1 : i32
    %c0_i32 = arith.constant 0 : i32
    %c0_i32_0 = arith.constant 0 : i32
    return %1, %c0_i32 : i32, i32
  }
  func.func @transform_2(%arg0: i32, %arg1: i32) -> (i32, i32) {
    %c0_i32 = arith.constant 0 : i32
    %c0_i32_0 = arith.constant 0 : i32
    %c0_i32_1 = arith.constant 0 : i32
    return %c0_i32, %c0_i32_0 : i32, i32
  }
  func.func @transform_3(%arg0: i32, %arg1: i32) -> (i32, i32, i32) {
    %c0_i32 = arith.constant 0 : i32
    %c0_i32_0 = arith.constant 0 : i32
    %c0_i32_1 = arith.constant 0 : i32
    return %arg0, %c0_i32, %c0_i32_0 : i32, i32, i32
  }
}

</mosaic_0001>

<llo_original>
// kernel: tpu_custom_call.1
$region0: #{tpu_custom_call.1}
  #allocation0 [shape = 'u32[]', space=smem, size = 0x4, offset = 0x4, fixed_abs, tag = 'smem constant byte address 0x4 - core index']
  #allocation1 [shape = 'u32[72,128]{1,0:T(1,128)}', space=vmem, size = 0x9000, scoped, tag = 'internal scratch']
  #allocation2 [shape = 'f32[1,32]{1,0:T(1,128)}', space=vmem, size = 0x200, scoped, tag = 'scratch operand']
  %s0 = inlined_call_operand.vmem [shape: s32[8,1], index: 0, kind: input, shape index: {}]
  %s1 = inlined_call_operand.vmem [shape: f32[8,32], index: 1, kind: input, shape index: {}]
  %s2 = inlined_call_operand.hbm [shape: f32[10,32], index: 2, kind: input, shape index: {}]
  %s3 = inlined_call_operand.hbm [shape: f32[1,8,128], index: 3, kind: output, shape index: {}]
  %s4 = sld [smem:[#allocation0]]
  $region42: #{tpu_custom_call.1} parent=0
    _
  %s6 = ssub.s32 1, %s4
  %s7 = scalar_select 0, %s6, %s4
  $region1: #{tpu_custom_call.1} parent=0
    #allocation3 [shape = 'u8[8192]{0}', space=vmem, size = 0x2000, scoped, tag = 'input window, operand 2, single buffered']
    #allocation4 [shape = 's32[1]{0}', space=sflag, size = 0x4, scoped, tag = 'scoped memory for tpu_custom_call.1']
    #allocation5 [shape = 's32[1]{0}', space=sflag, size = 0x4, scoped, tag = 'scoped memory for tpu_custom_call.1']
    #allocation6 [shape = 'u8[4096]{0}', space=vmem, size = 0x1000, scoped, tag = 'output window, operand 0, single buffered']
    %8 = vsyncpa [#allocation4], 0
    %9 = vsyncpa [#allocation5], 0
    // Predicated region
    $region2: #{tpu_custom_call.1} parent=1 // pred_check
      _
    $region3: #{tpu_custom_call.1} parent=1 // pred_check_branch
      %11 = sbr.rel (0) target = $region5
    $region4: #{tpu_custom_call.1} parent=1 // pred_region
      %s12 = sadd.s32 0, 0
      %p13 = scmp.lt.s32.totalorder %s12, 0
      %s14 = scalar_select %p13, %s12, 0
      %s15 = smul.addr %s14, 8
      %s16 = scalar_lea.vmem %s0, %s15
      %s17 = sadd.s32 0, 0
    $region5: #{tpu_custom_call.1} parent=1 // pred_fallthru
      _
    // Predicated region
    $region6: #{tpu_custom_call.1} parent=1 // pred_check
      _
    $region7: #{tpu_custom_call.1} parent=1 // pred_check_branch
      %19 = sbr.rel (0) target = $region9
    $region8: #{tpu_custom_call.1} parent=1 // pred_region
      %s20 = sadd.s32 0, 0
      %p21 = scmp.lt.s32.totalorder %s20, 0
      %s22 = scalar_select %p21, %s20, 0
      %s23 = smul.addr %s22, 8
      %s24 = scalar_lea.vmem %s1, %s23
      %s25 = sadd.s32 0, 0
    $region9: #{tpu_custom_call.1} parent=1 // pred_fallthru
      _
    // Predicated region
    $region10: #{tpu_custom_call.1} parent=1 // pred_check
      _
    $region11: #{tpu_custom_call.1} parent=1 // pred_check_branch
      %27 = sbr.rel (0) target = $region13
    $region12: #{tpu_custom_call.1} parent=1 // pred_region
      %29 = vsyncadd [#allocation4], 0
      %s30 = sshll.u32 %s2, 4
      %s31 = int_to_ptr.hbm [resolvable:$true] %s30
      %s32 = sshll.u32 [#allocation3], 4
      %s33 = int_to_ptr.vmem [resolvable:$true] %s32
      %38 = dma.hbm_to_vmem [thread:$0]  %s31, 256, %s33, [#allocation4], 128, 128, 8
    $region13: #{tpu_custom_call.1} parent=1 // pred_fallthru
      _
    // Predicated region
    $region14: #{tpu_custom_call.1} parent=1 // pred_check
      _
    $region15: #{tpu_custom_call.1} parent=1 // pred_check_branch
      %40 = sbr.rel (0) target = $region17
    $region16: #{tpu_custom_call.1} parent=1 // pred_region
      %42 = dma.done [#allocation4], 256
    $region17: #{tpu_custom_call.1} parent=1 // pred_fallthru
      _
    %s43 = sadd.s32 0, 0
    %p44 = scmp.lt.s32.totalorder %s43, 0
    %s45 = scalar_select %p44, %s43, 0
    %s46 = smul.addr %s45, 8
    %s47 = scalar_lea.vmem %s0, %s46
    %s48 = sadd.s32 0, 0
    %p49 = scmp.lt.s32.totalorder %s48, 0
    %s50 = scalar_select %p49, %s48, 0
    %s51 = smul.addr %s50, 8
    %s52 = scalar_lea.vmem %s1, %s51
    %s53 = sadd.s32 0, 0
    %p54 = scmp.lt.s32.totalorder %s53, 0
    %s55 = scalar_select %p54, %s53, 0
    %s56 = smul.addr %s55, 8
    %s57 = scalar_lea.vmem %s0, %s56
    %s58 = sadd.s32 0, 0
    %s59 = sadd.s32 0, 0
    %p60 = scmp.lt.s32.totalorder %s59, 0
    %s61 = scalar_select %p60, %s59, 0
    %s62 = smul.addr %s61, 8
    %s63 = scalar_lea.vmem %s1, %s62
    %s64 = sadd.s32 0, 0
    %s65 = sadd.s32 0, 0
    %p66 = scmp.eq.s32.totalorder 0, 0
    // Predicated region
    $region18: #{tpu_custom_call.1} parent=1 // pred_check
      %p67 = pneg %p66
    $region19: #{tpu_custom_call.1} parent=1 // pred_check_branch
      %69 = sbr.rel (%p67) target = $region21
    $region20: #{tpu_custom_call.1} parent=1 // pred_region
      %vm70 = vcmask 253952
      %71 = vst.msk [vmem:[#allocation2] sm:$0x1] %vm70, 0.0
    $region21: #{tpu_custom_call.1} parent=1 // pred_fallthru
      _
    %v72 = vld [vmem:[%s57] sm:$0xff]
    %v73 = vlaneseq
    %v74 = vand.u32 %v73, 127
    %75 = vset.pattern.permute.xlu0 0
    %76 = vperm.xlu0 %75, %v72
    %v77 = vpop.permute.xlu0 %76
    %vm78 = vcmp.eq.s32.totalorder %v74, %v77
    %v79 = vsel %vm78, 1, 0
    %v80 = vcvt.s32.f32 %v79
    %v81 = vld [vmem:[#allocation3] sm:$0xff]
    %v82 = vld [vmem:[#allocation3 + $0x8] sm:$0x3]
    %vm83 = vcmask 80896
    %v85 = vsel %vm83, %v80, 0
    %vm87 = vcmask 1041408
    %v89 = vsel %vm87, %v82, 0
    %91 = vmatpush.msra.mxu0 0.0
    %92 = vmatpush.msra.mxu0 0.0
    %93 = vmatpush.msra.mxu0 0.0
    %94 = vmatpush.msra.mxu0 0.0
    %95 = vmatpush.msra.mxu0 0.0
    %96 = vmatpush.msra.mxu0 0.0
    %97 = vmatpush.msra.mxu0 0.0
    %98 = vmatpush.msra.mxu0 0.0
    %99 = vmatpush.msra.mxu0 0.0
    %100 = vmatpush.msra.mxu0 0.0
    %101 = vmatpush.msra.mxu0 0.0
    %102 = vmatpush.msra.mxu0 0.0
    %103 = vmatpush.msra.mxu0 0.0
    %104 = vmatpush.msra.mxu0 0.0
    %105 = vmatpush.msra.mxu0 %v89
    %106 = vmatpush.msra.mxu0 %v81
    %107 = vmatmul.f32.gmra.mxu0 %v85
    %v108 = vpop.f32.mrf.mxu0
    %v109 = vadd.f32 0.0, %v108
    %110 = vdwg.mxu0
    %v111 = vld [vmem:[%s63] sm:$0xff]
    %v112 = vsub.f32 %v111, %v109
    %v113 = vmul.f32 %v112, %v112
    %p114 = scmp.ge.s32.totalorder %s65, 1
    // Predicated region
    $region22: #{tpu_custom_call.1} parent=1 // pred_check
      %p115 = pneg %p114
    $region23: #{tpu_custom_call.1} parent=1 // pred_check_branch
      %117 = sbr.rel (%p115) target = $region25
    $region24: #{tpu_custom_call.1} parent=1 // pred_region
      %s118 = smul.u32 %s65, 8
      %v119 = vlaneseq
      %v120 = vshrl.u32 %v119, 7
      %v121 = vstv %s118
      %v122 = vadd.s32 %v121, %v120
      %vm123 = vcmp.lt.s32.totalorder %v122, 8
      %v124 = vsel %vm123, 1, 0
      %vm125 = vcmp.eq.s32.totalorder %v124, 1
      %v126 = vsel %vm125, %v113, 0.0
      %v127 = vld [vmem:[#allocation2] sm:$0x1]
      %vm128 = vcmask 261120
      %v129 = vsel %vm128, %v126, 0.0
      %v130 = vrot.slane %v129, 4
      %v131 = vadd.f32 %v129, %v130
      %v132 = vrot.slane %v131, 2
      %v133 = vadd.f32 %v131, %v132
      %v134 = vrot.slane %v133, 1
      %v135 = vadd.f32 %v133, %v134
      %v136 = vadd.f32 %v127, %v135
      %vm137 = vcmask 253952
      %138 = vst.msk [vmem:[#allocation2] sm:$0x1] %vm137, %v136
    $region25: #{tpu_custom_call.1} parent=1 // pred_fallthru
      _
    %p139 = scmp.lt.s32.totalorder %s65, 1
    // Predicated region
    $region26: #{tpu_custom_call.1} parent=1 // pred_check
      %p140 = pneg %p139
    $region27: #{tpu_custom_call.1} parent=1 // pred_check_branch
      %142 = sbr.rel (%p140) target = $region29
    $region28: #{tpu_custom_call.1} parent=1 // pred_region
      %v143 = vld [vmem:[#allocation2] sm:$0x1]
      %vm144 = vcmask 261120
      %v145 = vsel %vm144, %v113, 0.0
      %v146 = vrot.slane %v145, 4
      %v147 = vadd.f32 %v145, %v146
      %v148 = vrot.slane %v147, 2
      %v149 = vadd.f32 %v147, %v148
      %v150 = vrot.slane %v149, 1
      %v151 = vadd.f32 %v149, %v150
      %v152 = vadd.f32 %v143, %v151
      %vm153 = vcmask 253952
      %154 = vst.msk [vmem:[#allocation2] sm:$0x1] %vm153, %v152
    $region29: #{tpu_custom_call.1} parent=1 // pred_fallthru
      _
    // Predicated region
    $region30: #{tpu_custom_call.1} parent=1 // pred_check
      %p155 = pneg %p66
    $region31: #{tpu_custom_call.1} parent=1 // pred_check_branch
      %157 = sbr.rel (%p155) target = $region33
    $region32: #{tpu_custom_call.1} parent=1 // pred_region
      %v158 = vld [vmem:[#allocation2] sm:$0x1]
      %vm159 = vcmask 253952
      %v160 = vsel %vm159, %v158, 0.0
      %161 = vadd.xlane.f32.xlu0 %v160
      %v162 = vpop.xlane.xlu0 %161
      %v163 = vrot.slane %v162, 4
      %v164 = vadd.f32 %v162, %v163
      %v165 = vrot.slane %v164, 2
      %v166 = vadd.f32 %v164, %v165
      %v167 = vrot.slane %v166, 1
      %v168 = vadd.f32 %v166, %v167
      %s169 = vtos %v168
      %s170 = smul.f32 %s169, 0.0625
      %v171 = vstv %s170
      %172 = vst [vmem:[#allocation6] sm:$0xff] %v171
    $region33: #{tpu_custom_call.1} parent=1 // pred_fallthru
      _
    // Predicated region
    $region34: #{tpu_custom_call.1} parent=1 // pred_check
      _
    $region35: #{tpu_custom_call.1} parent=1 // pred_check_branch
      %174 = sbr.rel (0) target = $region37
    $region36: #{tpu_custom_call.1} parent=1 // pred_region
      %176 = vsyncadd [#allocation5], 0
      %s178 = sshll.u32 [#allocation6], 4
      %s179 = int_to_ptr.vmem [resolvable:$true] %s178
      %s180 = sshll.u32 %s3, 4
      %s181 = int_to_ptr.hbm [resolvable:$true] %s180
      %183 = dma.vmem_to_hbm [thread:$0]  %s179, 128, %s181, [#allocation5]
    $region37: #{tpu_custom_call.1} parent=1 // pred_fallthru
      _
    // Predicated region
    $region38: #{tpu_custom_call.1} parent=1 // pred_check
      _
    $region39: #{tpu_custom_call.1} parent=1 // pred_check_branch
      %185 = sbr.rel (0) target = $region41
    $region40: #{tpu_custom_call.1} parent=1 // pred_region
      %187 = dma.done [#allocation5], 128
    $region41: #{tpu_custom_call.1} parent=1 // pred_fallthru
      _
    %188 = vsyncpa [#allocation4], 1
    %189 = vsyncpa [#allocation5], 1

</llo_original>
